<compile_context>
chip_gen: v5e
topology: v5e:2x2
jax: 0.10.0
libtpu: 0.0.40
codegen_flags: <defaults>
</compile_context>

<pallas_src>
import jax
import jax.numpy as jnp
from jax import lax
from jax.experimental import pallas as pl
from jax.experimental.pallas import tpu as pltpu


def discriminator_kernel(x_ref, w1_ref, b1_ref, w2_ref, b2_ref, o_ref):
    # ---- Layer 1 on the MXU: (TB, D) @ (D, H) -> (TB, H), f32 accumulate.
    x = x_ref[...].astype(w1_ref.dtype)            # bf16 operands -> full-rate MXU
    h = jnp.dot(x, w1_ref[...], preferred_element_type=jnp.float32)
    h = jnp.maximum(h + b1_ref[...], 0.0)          # bias + ReLU in f32 (VPU)

    # ---- Layer 2 on the MXU, emitting the lane-dense row directly:
    # contract H between w2 (1, H) and h (TB, H) -> (1, TB).  No XLU transpose
    # of the (TB, H) tensor, no (TB, H) VPU multiply; the MXU is idle after
    # layer 1 so this is essentially free.
    hb = h.astype(w2_ref.dtype)                    # bf16 for full MXU rate
    z = lax.dot_general(
        w2_ref[...], hb,
        dimension_numbers=(((1,), (1,)), ((), ())),
        preferred_element_type=jnp.float32)        # (1, TB)
    z = z + b2_ref[0]                              # scalar bias from SMEM

    # ---- Numerically stable sigmoid: exp argument is always <= 0 (never inf).
    # exp and the approximate reciprocal both run on the EUP slot.
    e = jnp.exp(-jnp.abs(z))
    r = pl.reciprocal(1.0 + e, approx=True)
    o_ref[...] = jnp.where(z >= 0.0, r, e * r).astype(o_ref.dtype)


def _pick_tile_b(batch, data_dim, hidden, itemsize):
    """Largest power-of-two-ish tile (multiple of 128) that
       * divides the batch,
       * keeps the grid length >= 2 when the batch allows (v7x: 2 TensorCores),
       * keeps (x double buffer) + (~3x f32 (TB, H) intermediates) under a
         conservative 12 MiB VMEM budget (safe on v5e's 16 MiB scoped default,
         v6e's 32 MiB, and v7x's 32 MiB scoped / 64 MiB physical)."""
    budget = 12 << 20
    cap = batch // 2 if batch >= 256 else batch    # grid >= 2 for megacore
    for tb in (8192, 4096, 2048, 1024, 512, 256, 128):
        if tb > cap or batch % tb != 0:
            continue
        footprint = 2 * tb * data_dim * itemsize + 3 * tb * hidden * 4
        if footprint <= budget:
            return tb
    return batch  # tiny / awkward batch: single full-array tile (always legal)


def discriminator_forward(x, w1, b1, w2, b2, *, tile_b=None,
                          compute_dtype=jnp.bfloat16):
    """x: (B, D); w1: (D, H); b1: (H,) or (1, H); w2: (H, 1) or (H,); b2: scalar-like.
    Returns sigmoid(relu(x @ w1 + b1) @ w2 + b2), shape (B, 1), float32.

    Note: if the upstream producer of x can emit bf16, pass it directly --
    x dominates HBM bytes and bf16 halves the streamed traffic.  Do not add a
    standalone wrapper-side astype just for this kernel."""
    B, D = x.shape
    H = w1.shape[1]

    # Normalize parameter shapes / dtypes once, outside the kernel.
    w1c = w1.astype(compute_dtype)                        # weights cast wrapper-side
    b1r = jnp.asarray(b1, jnp.float32).reshape(1, H)
    w2r = jnp.asarray(w2, jnp.float32).reshape(1, H).astype(compute_dtype)
    b2s = jnp.asarray(b2, jnp.float32).reshape(1)         # scalar -> SMEM

    TB = _pick_tile_b(B, D, H, x.dtype.itemsize) if tile_b is None else tile_b
    assert B % TB == 0, "tile_b must divide the batch"
    assert TB == B or TB % 128 == 0, (
        "tile_b must be a multiple of 128 (lane-dense output tiles) or the full batch")
    grid = (B // TB,)

    out_row = pl.pallas_call(
        discriminator_kernel,
        out_shape=jax.ShapeDtypeStruct((1, B), jnp.float32),
        grid=grid,
        in_specs=[
            pl.BlockSpec((TB, D), lambda i: (i, 0)),              # x tile (pipelined)
            pl.BlockSpec((D, H), lambda i: (0, 0)),               # W1, resident
            pl.BlockSpec((1, H), lambda i: (0, 0)),               # b1 row
            pl.BlockSpec((1, H), lambda i: (0, 0)),               # w2 row (bf16)
            pl.BlockSpec(memory_space=pltpu.MemorySpace.SMEM),    # b2 scalar
        ],
        out_specs=pl.BlockSpec((1, TB), lambda i: (0, i)),        # lane-dense row
        compiler_params=pltpu.CompilerParams(
            dimension_semantics=("parallel",),                    # megacore-shardable
        ),
    )(x, w1c, b1r, w2r, b2s)

    return out_row.reshape(B, 1)


def reference_forward(x, w1, b1, w2, b2, compute_dtype=jnp.bfloat16):
    # Mirrors the kernel's compute precision (bf16 MXU operands, f32 accumulate)
    # so the comparison isolates the approximate-reciprocal / stable-sigmoid
    # differences only.
    h = jnp.dot(x.astype(compute_dtype), w1.astype(compute_dtype),
                preferred_element_type=jnp.float32)
    h = jnp.maximum(h + jnp.reshape(b1, (1, -1)), 0.0)
    z = jnp.dot(h.astype(compute_dtype),
                jnp.reshape(w2, (-1, 1)).astype(compute_dtype),
                preferred_element_type=jnp.float32) + jnp.reshape(b2, (1, 1))
    return jax.nn.sigmoid(z)


if __name__ == "__main__":
    # Small shapes consistent with the module: data_dim=32, hidden=128 (fixed by
    # the nn.Module); batch=512 -> auto tile TB=256, grid=(2,) (both v7x TCs).
    B, D, H = 512, 32, 128

    key = jax.random.PRNGKey(0)
    kx, kw1, kb1, kw2, kb2 = jax.random.split(key, 5)

    x = jax.random.normal(kx, (B, D), dtype=jnp.float32)

    # Deterministic parameter init (PyTorch Linear default-like uniform scale),
    # stored pre-transposed as (in, out).
    lim1 = 1.0 / jnp.sqrt(D)
    lim2 = 1.0 / jnp.sqrt(H)
    w1 = jax.random.uniform(kw1, (D, H), jnp.float32, -lim1, lim1)
    b1 = jax.random.uniform(kb1, (H,), jnp.float32, -lim1, lim1)
    w2 = jax.random.uniform(kw2, (H, 1), jnp.float32, -lim2, lim2)
    b2 = jax.random.uniform(kb2, (1,), jnp.float32, -lim2, lim2)

    out = discriminator_forward(x, w1, b1, w2, b2)
    out = jax.block_until_ready(out)

    ref = reference_forward(x, w1, b1, w2, b2)
    assert out.shape == (B, 1)
    assert jnp.allclose(out, ref, atol=5e-3), float(jnp.max(jnp.abs(out - ref)))

    print("KERNEL_OK")
</pallas_src>

<mosaic_0001>
module attributes {stable_mosaic.version = 11 : i64} {
  func.func @discriminator_kernel(%arg0: i32, %arg1: memref<256x32xf32, #tpu.memory_space<vmem>>, %arg2: memref<32x128xbf16, #tpu.memory_space<vmem>>, %arg3: memref<1x128xf32, #tpu.memory_space<vmem>>, %arg4: memref<1x128xbf16, #tpu.memory_space<vmem>>, %arg5: memref<1xf32, #tpu.memory_space<smem>>, %arg6: memref<1x256xf32, #tpu.memory_space<vmem>>) attributes {dimension_semantics = [#tpu.dimension_semantics<parallel>], iteration_bounds = array<i64: 2>, scalar_prefetch = 0 : i64, scratch_operands = 0 : i64, tpu.core_type = #tpu.core_type<tc>, window_params = [{transform_indices = @transform_0, window_bounds = array<i64: 256, 32>}, {pipeline_mode = #tpu.pipeline_mode<synchronous>, transform_indices = @transform_1, window_bounds = array<i64: 32, 128>}, {pipeline_mode = #tpu.pipeline_mode<synchronous>, transform_indices = @transform_2, window_bounds = array<i64: 1, 128>}, {pipeline_mode = #tpu.pipeline_mode<synchronous>, transform_indices = @transform_3, window_bounds = array<i64: 1, 128>}, {transform_indices = @transform_4, window_bounds = array<i64: 1>}, {transform_indices = @transform_5, window_bounds = array<i64: 1, 256>}]} {
    %c0 = arith.constant 0 : index
    %c0_0 = arith.constant 0 : index
    %0 = vector.load %arg1[%c0, %c0_0] : memref<256x32xf32, #tpu.memory_space<vmem>>, vector<256x32xf32>
    %1 = arith.truncf %0 : vector<256x32xf32> to vector<256x32xbf16>
    %c0_1 = arith.constant 0 : index
    %c0_2 = arith.constant 0 : index
    %2 = vector.load %arg2[%c0_1, %c0_2] : memref<32x128xbf16, #tpu.memory_space<vmem>>, vector<32x128xbf16>
    %cst = arith.constant dense<0.000000e+00> : vector<256x128xf32>
    %3 = tpu.matmul %1, %2, %cst {dimension_numbers = #tpu.dot_dimension_numbers<[1], [0], [0], [1], [0, 0, 1, 1], [], []>} : vector<256x32xbf16>, vector<32x128xbf16>, vector<256x128xf32> -> vector<256x128xf32>
    %c0_3 = arith.constant 0 : index
    %c0_4 = arith.constant 0 : index
    %4 = vector.load %arg3[%c0_3, %c0_4] : memref<1x128xf32, #tpu.memory_space<vmem>>, vector<1x128xf32>
    %5 = vector.broadcast %4 : vector<1x128xf32> to vector<256x128xf32>
    %6 = arith.addf %3, %5 : vector<256x128xf32>
    %cst_5 = arith.constant 0.000000e+00 : f32
    %7 = vector.broadcast %cst_5 : f32 to vector<256x128xf32>
    %8 = arith.maximumf %6, %7 : vector<256x128xf32>
    %9 = arith.truncf %8 : vector<256x128xf32> to vector<256x128xbf16>
    %c0_6 = arith.constant 0 : index
    %c0_7 = arith.constant 0 : index
    %10 = vector.load %arg4[%c0_6, %c0_7] : memref<1x128xbf16, #tpu.memory_space<vmem>>, vector<1x128xbf16>
    %cst_8 = arith.constant dense<0.000000e+00> : vector<1x256xf32>
    %11 = tpu.matmul %10, %9, %cst_8 {dimension_numbers = #tpu.dot_dimension_numbers<[1], [1], [0], [0], [0, 0, 1, 0], [], []>} : vector<1x128xbf16>, vector<256x128xbf16>, vector<1x256xf32> -> vector<1x256xf32>
    %c0_9 = arith.constant 0 : index
    %12 = memref.load %arg5[%c0_9] : memref<1xf32, #tpu.memory_space<smem>>
    %13 = vector.broadcast %12 : f32 to vector<1x256xf32>
    %14 = arith.addf %11, %13 : vector<1x256xf32>
    %15 = math.absf %14 : vector<1x256xf32>
    %cst_10 = arith.constant 0.000000e+00 : f32
    %16 = vector.broadcast %cst_10 : f32 to vector<1x256xf32>
    %17 = arith.subf %16, %15 : vector<1x256xf32>
    %18 = math.exp %17 : vector<1x256xf32>
    %cst_11 = arith.constant 1.000000e+00 : f32
    %19 = vector.broadcast %cst_11 : f32 to vector<1x256xf32>
    %20 = arith.addf %19, %18 : vector<1x256xf32>
    %21 = tpu.reciprocal %20 {approx = true} : vector<1x256xf32> -> vector<1x256xf32>
    %cst_12 = arith.constant 0.000000e+00 : f32
    %22 = vector.broadcast %cst_12 : f32 to vector<1x256xf32>
    %23 = arith.cmpf oge, %14, %22 : vector<1x256xf32>
    %24 = arith.mulf %18, %21 : vector<1x256xf32>
    %25 = arith.select %23, %21, %24 : vector<1x256xi1>, vector<1x256xf32>
    %c0_13 = arith.constant 0 : index
    %c0_14 = arith.constant 0 : index
    %26 = vector.load %arg6[%c0_13, %c0_14] : memref<1x256xf32, #tpu.memory_space<vmem>>, vector<1x256xf32>
    tpu.vector_store %arg6[%c0_13, %c0_14], %25 {strides = array<i32>} : memref<1x256xf32, #tpu.memory_space<vmem>>, vector<1x256xf32>,
    return
  }
  func.func @transform_0(%arg0: i32) -> (i32, i32) {
    %c0_i32 = arith.constant 0 : i32
    %c0_i32_0 = arith.constant 0 : i32
    return %arg0, %c0_i32 : i32, i32
  }
  func.func @transform_1(%arg0: i32) -> (i32, i32) {
    %c0_i32 = arith.constant 0 : i32
    %c0_i32_0 = arith.constant 0 : i32
    %c0_i32_1 = arith.constant 0 : i32
    return %c0_i32, %c0_i32_0 : i32, i32
  }
  func.func @transform_2(%arg0: i32) -> (i32, i32) {
    %c0_i32 = arith.constant 0 : i32
    %c0_i32_0 = arith.constant 0 : i32
    %c0_i32_1 = arith.constant 0 : i32
    return %c0_i32, %c0_i32_0 : i32, i32
  }
  func.func @transform_3(%arg0: i32) -> (i32, i32) {
    %c0_i32 = arith.constant 0 : i32
    %c0_i32_0 = arith.constant 0 : i32
    %c0_i32_1 = arith.constant 0 : i32
    return %c0_i32, %c0_i32_0 : i32, i32
  }
  func.func @transform_4(%arg0: i32) -> i32 {
    %c0_i32 = arith.constant 0 : i32
    %c0_i32_0 = arith.constant 0 : i32
    return %c0_i32 : i32
  }
  func.func @transform_5(%arg0: i32) -> (i32, i32) {
    %c0_i32 = arith.constant 0 : i32
    %c0_i32_0 = arith.constant 0 : i32
    return %c0_i32, %arg0 : i32, i32
  }
}

</mosaic_0001>

<llo_original>
// kernel: tpu_custom_call.1
$region0: #{tpu_custom_call.1}
  #allocation0 [shape = 'u32[]', space=smem, size = 0x4, offset = 0x4, fixed_abs, tag = 'smem constant byte address 0x4 - core index']
  #allocation1 [shape = 'u32[72,128]{1,0:T(1,128)}', space=vmem, size = 0x9000, scoped, tag = 'internal scratch']
  #allocation2 [shape = 'f32[1]{0:T(128)S(6)}', space=smem, size = 0x200, scoped, tag = 'scoped memory for tpu_custom_call.1']
  %s0 = inlined_call_operand.vmem [shape: f32[512,32], index: 0, kind: input, shape index: {}]
  %s1 = inlined_call_operand.vmem [shape: bf16[32,128], index: 1, kind: input, shape index: {}]
  %s2 = inlined_call_operand.vmem [shape: f32[1,128], index: 2, kind: input, shape index: {}]
  %s3 = inlined_call_operand.vmem [shape: bf16[1,128], index: 3, kind: input, shape index: {}]
  %s4 = inlined_call_operand.<no memory space> [shape: f32[1], index: 4, kind: input, shape index: {}]
  %s5 = inlined_call_operand.hbm [shape: f32[1,512], index: 5, kind: output, shape index: {}]
  %s6 = sld [smem:[#allocation0]]
  $region53: #{tpu_custom_call.1} parent=0
    _
  %s8 = ssub.s32 1, %s6
  %s9 = scalar_select 0, %s8, %s6
  %10 = sst [smem:[#allocation2]] %s4
  $region1: #{tpu_custom_call.1} parent=0
    #allocation3 [shape = 'u8[2048]{0}', space=vmem, size = 0x800, scoped, tag = 'output window, operand 0']
    #allocation4 [shape = 's32[2]{0}', space=sflag, size = 0x8, scoped, tag = 'scoped memory for tpu_custom_call.1']
    %11 = vsyncpa [#allocation4], 0
    %s12 = scalar_lea.sflag [#allocation4], 1
    %13 = vsyncpa %s12, 0
    loop: start=0, step=1, limit=4
    $region2: #{tpu_custom_call.1} parent=1 // loop_pre_header
      _
    $region3: #{tpu_custom_call.1} parent=1 // loop_header
      %s15 = sphi 0, %s19
      %p16 = scmp.ge.s32.totalorder %s15, 4
      %s25 = sphi 0, %s27
      %s28 = sphi 0, %s25
      %s29 = sphi 0, %s28
      %s45 = sphi 0, %s29
      %s49 = sphi 0, %s49
      %s51 = sphi 0, %s49
      %s52 = sphi 0, %s51
      %s66 = sphi 0, %s52
      %s70 = sphi 0, %s70
      %s72 = sphi 0, %s70
      %s73 = sphi 0, %s72
      %s87 = sphi 0, %s73
      %s91 = sphi 0, %s91
      %s93 = sphi 0, %s91
      %s94 = sphi 0, %s93
      %s108 = sphi 0, %s94
      %s112 = sphi 0, %s112
      %s114 = sphi 0, %s112
      %s115 = sphi 0, %s114
      %s129 = sphi 0, %s115
      %s135 = sphi 0, %s137
      %s138 = sphi 0, %s135
      %s139 = sphi 0, %s138
      %s155 = sphi 0, %s139
    $region4: #{tpu_custom_call.1} parent=1 // loop_header_branch
      %18 = sbr.rel (%p16) target = $region8
    $region5: #{tpu_custom_call.1} parent=1 // loop_body
      %s20 = ssub.s32 %s15, 1
      %s21 = ssub.s32 %s15, 2
      %s22 = sadd.s32 %s15, 1
      %s23 = ssub.s32 %s15, %s22
      %p24 = scmp.eq.s32.totalorder %s23, 0
      %s26 = sadd.s32 %s25, 1
      %s27 = scalar_select %p24, %s25, %s26
      %p30 = pneg %p24
      %p31 = scmp.eq.s32.totalorder %s15, 1
      %p32 = por %p30, %p31
      %p33 = scmp.ne.s32.totalorder %s25, %s28
      %p34 = scmp.eq.s32.totalorder %s15, 0
      %p35 = por %p33, %p34
      %p36 = scmp.ne.s32.totalorder %s25, %s28
      %p37 = scmp.eq.s32.totalorder %s20, 1
      %p38 = por %p36, %p37
      %p39 = scmp.ne.s32.totalorder %s28, %s29
      %p40 = scmp.eq.s32.totalorder %s20, 0
      %p41 = por %p39, %p40
      %p42 = scmp.ne.s32.totalorder %s28, %s29
      %p43 = scmp.eq.s32.totalorder %s21, 1
      %p44 = por %p42, %p43
      %p46 = scmp.ne.s32.totalorder %s29, %s45
      %p47 = scmp.eq.s32.totalorder %s21, 0
      %p48 = por %p46, %p47
      %s50 = sadd.s32 %s49, 1
      %p53 = scmp.eq.s32.totalorder %s15, 1
      %p54 = scmp.ne.s32.totalorder %s49, %s51
      %p55 = scmp.eq.s32.totalorder %s15, 0
      %p56 = por %p54, %p55
      %p57 = scmp.ne.s32.totalorder %s49, %s51
      %p58 = scmp.eq.s32.totalorder %s20, 1
      %p59 = por %p57, %p58
      %p60 = scmp.ne.s32.totalorder %s51, %s52
      %p61 = scmp.eq.s32.totalorder %s20, 0
      %p62 = por %p60, %p61
      %p63 = scmp.ne.s32.totalorder %s51, %s52
      %p64 = scmp.eq.s32.totalorder %s21, 1
      %p65 = por %p63, %p64
      %p67 = scmp.ne.s32.totalorder %s52, %s66
      %p68 = scmp.eq.s32.totalorder %s21, 0
      %p69 = por %p67, %p68
      %s71 = sadd.s32 %s70, 1
      %p74 = scmp.eq.s32.totalorder %s15, 1
      %p75 = scmp.ne.s32.totalorder %s70, %s72
      %p76 = scmp.eq.s32.totalorder %s15, 0
      %p77 = por %p75, %p76
      %p78 = scmp.ne.s32.totalorder %s70, %s72
      %p79 = scmp.eq.s32.totalorder %s20, 1
      %p80 = por %p78, %p79
      %p81 = scmp.ne.s32.totalorder %s72, %s73
      %p82 = scmp.eq.s32.totalorder %s20, 0
      %p83 = por %p81, %p82
      %p84 = scmp.ne.s32.totalorder %s72, %s73
      %p85 = scmp.eq.s32.totalorder %s21, 1
      %p86 = por %p84, %p85
      %p88 = scmp.ne.s32.totalorder %s73, %s87
      %p89 = scmp.eq.s32.totalorder %s21, 0
      %p90 = por %p88, %p89
      %s92 = sadd.s32 %s91, 1
      %p95 = scmp.eq.s32.totalorder %s15, 1
      %p96 = scmp.ne.s32.totalorder %s91, %s93
      %p97 = scmp.eq.s32.totalorder %s15, 0
      %p98 = por %p96, %p97
      %p99 = scmp.ne.s32.totalorder %s91, %s93
      %p100 = scmp.eq.s32.totalorder %s20, 1
      %p101 = por %p99, %p100
      %p102 = scmp.ne.s32.totalorder %s93, %s94
      %p103 = scmp.eq.s32.totalorder %s20, 0
      %p104 = por %p102, %p103
      %p105 = scmp.ne.s32.totalorder %s93, %s94
      %p106 = scmp.eq.s32.totalorder %s21, 1
      %p107 = por %p105, %p106
      %p109 = scmp.ne.s32.totalorder %s94, %s108
      %p110 = scmp.eq.s32.totalorder %s21, 0
      %p111 = por %p109, %p110
      %s113 = sadd.s32 %s112, 1
      %p116 = scmp.eq.s32.totalorder %s15, 1
      %p117 = scmp.ne.s32.totalorder %s112, %s114
      %p118 = scmp.eq.s32.totalorder %s15, 0
      %p119 = por %p117, %p118
      %p120 = scmp.ne.s32.totalorder %s112, %s114
      %p121 = scmp.eq.s32.totalorder %s20, 1
      %p122 = por %p120, %p121
      %p123 = scmp.ne.s32.totalorder %s114, %s115
      %p124 = scmp.eq.s32.totalorder %s20, 0
      %p125 = por %p123, %p124
      %p126 = scmp.ne.s32.totalorder %s114, %s115
      %p127 = scmp.eq.s32.totalorder %s21, 1
      %p128 = por %p126, %p127
      %p130 = scmp.ne.s32.totalorder %s115, %s129
      %p131 = scmp.eq.s32.totalorder %s21, 0
      %p132 = por %p130, %p131
      %s133 = ssub.s32 %s15, %s22
      %p134 = scmp.eq.s32.totalorder %s133, 0
      %s136 = sadd.s32 %s135, 1
      %s137 = scalar_select %p134, %s135, %s136
      %p140 = pneg %p134
      %p141 = scmp.eq.s32.totalorder %s15, 1
      %p142 = por %p140, %p141
      %p143 = scmp.ne.s32.totalorder %s135, %s138
      %p144 = scmp.eq.s32.totalorder %s15, 0
      %p145 = por %p143, %p144
      %p146 = scmp.ne.s32.totalorder %s135, %s138
      %p147 = scmp.eq.s32.totalorder %s20, 1
      %p148 = por %p146, %p147
      %p149 = scmp.ne.s32.totalorder %s138, %s139
      %p150 = scmp.eq.s32.totalorder %s20, 0
      %p151 = por %p149, %p150
      %p152 = scmp.ne.s32.totalorder %s138, %s139
      %p153 = scmp.eq.s32.totalorder %s21, 1
      %p154 = por %p152, %p153
      %p156 = scmp.ne.s32.totalorder %s139, %s155
      %p157 = scmp.eq.s32.totalorder %s21, 0
      %p158 = por %p156, %p157
      %p159 = scmp.le.s32.totalorder 1, %s15
      %p160 = scmp.lt.s32.totalorder %s15, 3
      %p161 = pnand %p159, %p160
      %p162 = pneg %p161
      // Predicated region
      $region9: #{tpu_custom_call.1} parent=5 // pred_check
        _
      $region10: #{tpu_custom_call.1} parent=5 // pred_check_branch
        %164 = sbr.rel (%p161) target = $region12
      $region11: #{tpu_custom_call.1} parent=5 // pred_region
        %s165 = ssub.s32 %s15, 1
        // Predicated region
        $region13: #{tpu_custom_call.1} parent=11 // pred_check
          %p166 = pneg %p62
        $region14: #{tpu_custom_call.1} parent=11 // pred_check_branch
          %168 = sbr.rel (%p166) target = $region16
        $region15: #{tpu_custom_call.1} parent=11 // pred_region
          _
        $region16: #{tpu_custom_call.1} parent=11 // pred_fallthru
          _
        // Predicated region
        $region17: #{tpu_custom_call.1} parent=11 // pred_check
          %p169 = pneg %p83
        $region18: #{tpu_custom_call.1} parent=11 // pred_check_branch
          %171 = sbr.rel (%p169) target = $region20
        $region19: #{tpu_custom_call.1} parent=11 // pred_region
          _
        $region20: #{tpu_custom_call.1} parent=11 // pred_fallthru
          _
        // Predicated region
        $region21: #{tpu_custom_call.1} parent=11 // pred_check
          %p172 = pneg %p104
        $region22: #{tpu_custom_call.1} parent=11 // pred_check_branch
          %174 = sbr.rel (%p172) target = $region24
        $region23: #{tpu_custom_call.1} parent=11 // pred_region
          _
        $region24: #{tpu_custom_call.1} parent=11 // pred_fallthru
          _
        // Predicated region
        $region25: #{tpu_custom_call.1} parent=11 // pred_check
          %p175 = pneg %p125
        $region26: #{tpu_custom_call.1} parent=11 // pred_check_branch
          %177 = sbr.rel (%p175) target = $region28
        $region27: #{tpu_custom_call.1} parent=11 // pred_region
          _
        $region28: #{tpu_custom_call.1} parent=11 // pred_fallthru
          _
      $region12: #{tpu_custom_call.1} parent=5 // pred_fallthru
        _
      %p178 = scmp.lt.s32.totalorder %s15, 2
      // Predicated region
      $region29: #{tpu_custom_call.1} parent=5 // pred_check
        %p179 = pneg %p178
      $region30: #{tpu_custom_call.1} parent=5 // pred_check_branch
        %181 = sbr.rel (%p179) target = $region32
      $region31: #{tpu_custom_call.1} parent=5 // pred_region
        // Predicated region
        $region33: #{tpu_custom_call.1} parent=31 // pred_check
          %p182 = pneg %p35
        $region34: #{tpu_custom_call.1} parent=31 // pred_check_branch
          %184 = sbr.rel (%p182) target = $region36
        $region35: #{tpu_custom_call.1} parent=31 // pred_region
          %s185 = smul.u32 32, %s15
          %p186 = scmp.lt.s32.totalorder %s185, 63
          %s187 = scalar_select %p186, %s185, 63
          %s188 = smul.addr %s187, 8
          %s189 = scalar_lea.vmem %s0, %s188
          %s190 = smul.u32 32, %s15
        $region36: #{tpu_custom_call.1} parent=31 // pred_fallthru
          _
      $region32: #{tpu_custom_call.1} parent=5 // pred_fallthru
        _
      %p191 = scmp.le.s32.totalorder 1, %s15
      %p192 = scmp.lt.s32.totalorder %s15, 3
      %p193 = pnand %p191, %p192
      %p194 = pneg %p193
      // Predicated region
      $region37: #{tpu_custom_call.1} parent=5 // pred_check
        _
      $region38: #{tpu_custom_call.1} parent=5 // pred_check_branch
        %196 = sbr.rel (%p193) target = $region40
      $region39: #{tpu_custom_call.1} parent=5 // pred_region
        %s197 = ssub.s32 %s15, 1
        %s198 = smul.u32 32, %s20
        %p199 = scmp.lt.s32.totalorder %s198, 63
        %s200 = scalar_select %p199, %s198, 63
        %s201 = smul.addr %s200, 8
        %s202 = scalar_lea.vmem %s0, %s201
        %p203 = pneg %p41
        %p204 = pneg %p38
        %p205 = pneg %p62
        %p206 = pneg %p59
        %p207 = pneg %p83
        %p208 = pneg %p80
        %p209 = pneg %p104
        %p210 = pneg %p101
        %p211 = pneg %p125
        %p212 = pneg %p122
        %p213 = pneg %p151
        %p214 = pneg %p148
        %s215 = sand.u32 %s138, 1
        %s216 = scalar_lea.sflag [#allocation4], %s215
        %s217 = sand.u32 %s138, 1
        %s218 = smul.addr %s217, 2
        %s219 = scalar_lea.vmem [#allocation3], %s218
        %s220 = smul.u32 32, %s20
        %p221 = scmp.lt.s32.totalorder %s220, 63
        %s222 = scalar_select %p221, %s220, 63
        %s223 = smul.addr %s222, 8
        %s224 = scalar_lea.vmem %s0, %s223
        %s225 = smul.u32 32, %s20
        %s226 = smul.u32 2, %s20
        %v228 = vld [vmem:[%s224] sm:$0xff]
        %v229 = vld [vmem:[%s224 + $0x8] sm:$0xff]
        %v230 = vld [vmem:[%s224 + $0x10] sm:$0xff]
        %v231 = vld [vmem:[%s224 + $0x18] sm:$0xff]
        %v232 = vld [vmem:[%s224 + $0x20] sm:$0xff]
        %v233 = vld [vmem:[%s224 + $0x28] sm:$0xff]
        %v234 = vld [vmem:[%s224 + $0x30] sm:$0xff]
        %v235 = vld [vmem:[%s224 + $0x38] sm:$0xff]
        %v236 = vld [vmem:[%s224 + $0x40] sm:$0xff]
        %v237 = vld [vmem:[%s224 + $0x48] sm:$0xff]
        %v238 = vld [vmem:[%s224 + $0x50] sm:$0xff]
        %v239 = vld [vmem:[%s224 + $0x58] sm:$0xff]
        %v240 = vld [vmem:[%s224 + $0x60] sm:$0xff]
        %v241 = vld [vmem:[%s224 + $0x68] sm:$0xff]
        %v242 = vld [vmem:[%s224 + $0x70] sm:$0xff]
        %v243 = vld [vmem:[%s224 + $0x78] sm:$0xff]
        %v244 = vld [vmem:[%s224 + $0x80] sm:$0xff]
        %v245 = vld [vmem:[%s224 + $0x88] sm:$0xff]
        %v246 = vld [vmem:[%s224 + $0x90] sm:$0xff]
        %v247 = vld [vmem:[%s224 + $0x98] sm:$0xff]
        %v248 = vld [vmem:[%s224 + $0xa0] sm:$0xff]
        %v249 = vld [vmem:[%s224 + $0xa8] sm:$0xff]
        %v250 = vld [vmem:[%s224 + $0xb0] sm:$0xff]
        %v251 = vld [vmem:[%s224 + $0xb8] sm:$0xff]
        %v252 = vld [vmem:[%s224 + $0xc0] sm:$0xff]
        %v253 = vld [vmem:[%s224 + $0xc8] sm:$0xff]
        %v254 = vld [vmem:[%s224 + $0xd0] sm:$0xff]
        %v255 = vld [vmem:[%s224 + $0xd8] sm:$0xff]
        %v256 = vld [vmem:[%s224 + $0xe0] sm:$0xff]
        %v257 = vld [vmem:[%s224 + $0xe8] sm:$0xff]
        %v258 = vld [vmem:[%s224 + $0xf0] sm:$0xff]
        %v259 = vld [vmem:[%s224 + $0xf8] sm:$0xff]
        %v260 = vpack.c.bf16 %v229, %v228
        %v261 = vpack.c.bf16 %v231, %v230
        %v262 = vpack.c.bf16 %v233, %v232
        %v263 = vpack.c.bf16 %v235, %v234
        %v264 = vpack.c.bf16 %v237, %v236
        %v265 = vpack.c.bf16 %v239, %v238
        %v266 = vpack.c.bf16 %v241, %v240
        %v267 = vpack.c.bf16 %v243, %v242
        %v268 = vpack.c.bf16 %v245, %v244
        %v269 = vpack.c.bf16 %v247, %v246
        %v270 = vpack.c.bf16 %v249, %v248
        %v271 = vpack.c.bf16 %v251, %v250
        %v272 = vpack.c.bf16 %v253, %v252
        %v273 = vpack.c.bf16 %v255, %v254
        %v274 = vpack.c.bf16 %v257, %v256
        %v275 = vpack.c.bf16 %v259, %v258
        %v276 = vld [vmem:[%s1] sm:$0xf]
        %v277 = vld [vmem:[%s1 + $0x4] sm:$0xf]
        %v278 = vld [vmem:[%s1 + $0x8] sm:$0xf]
        %v279 = vld [vmem:[%s1 + $0xc] sm:$0xf]
        %v280 = vld [vmem:[%s2] sm:$0x1]
        %v282 = vperm.slane %v280, 0
        %v288 = vunpack.c.l.b16 %v276
        %v289 = vunpack.c.l.b16 %v277
        %v290 = vunpack.c.l.b16 %v278
        %v291 = vunpack.c.l.b16 %v279
        %v292 = vpack.c.b16 %v289, %v288
        %v293 = vpack.c.b16 %v291, %v290
        %vm296 = vcmask 261120
        %v298 = vsel %vm296, %v260, 0
        %v301 = vsel %vm296, %v261, 0
        %v304 = vsel %vm296, %v262, 0
        %v307 = vsel %vm296, %v263, 0
        %v310 = vsel %vm296, %v264, 0
        %v313 = vsel %vm296, %v265, 0
        %v316 = vsel %vm296, %v266, 0
        %v319 = vsel %vm296, %v267, 0
        %v322 = vsel %vm296, %v268, 0
        %v325 = vsel %vm296, %v269, 0
        %v328 = vsel %vm296, %v270, 0
        %v331 = vsel %vm296, %v271, 0
        %v334 = vsel %vm296, %v272, 0
        %v337 = vsel %vm296, %v273, 0
        %v340 = vsel %vm296, %v274, 0
        %v343 = vsel %vm296, %v275, 0
        %345 = vmatpush.bf16.msra.mxu0 0
        %346 = vmatpush.bf16.msra.mxu0 0
        %347 = vmatpush.bf16.msra.mxu0 0
        %348 = vmatpush.bf16.msra.mxu0 0
        %349 = vmatpush.bf16.msra.mxu0 0
        %350 = vmatpush.bf16.msra.mxu0 0
        %351 = vmatpush.bf16.msra.mxu0 %v293
        %352 = vmatpush.bf16.msra.mxu0 %v292
        %353 = vmatmul.bf16.gmra.mxu0 %v298
        %v354 = vpop.f32.mrf.mxu0
        %v355 = vadd.f32 %v282, %v354
        %v356 = vpop.f32.mrf.mxu0
        %v357 = vadd.f32 %v282, %v356
        %358 = vmatmul.bf16.gmra.mxu0 %v301
        %v359 = vpop.f32.mrf.mxu0
        %v360 = vadd.f32 %v282, %v359
        %v361 = vpop.f32.mrf.mxu0
        %v362 = vadd.f32 %v282, %v361
        %363 = vmatmul.bf16.gmra.mxu0 %v304
        %v364 = vpop.f32.mrf.mxu0
        %v365 = vadd.f32 %v282, %v364
        %v366 = vpop.f32.mrf.mxu0
        %v367 = vadd.f32 %v282, %v366
        %368 = vmatmul.bf16.gmra.mxu0 %v307
        %v369 = vpop.f32.mrf.mxu0
        %v370 = vadd.f32 %v282, %v369
        %v371 = vpop.f32.mrf.mxu0
        %v372 = vadd.f32 %v282, %v371
        %373 = vmatmul.bf16.gmra.mxu0 %v310
        %v374 = vpop.f32.mrf.mxu0
        %v375 = vadd.f32 %v282, %v374
        %v376 = vpop.f32.mrf.mxu0
        %v377 = vadd.f32 %v282, %v376
        %378 = vmatmul.bf16.gmra.mxu0 %v313
        %v379 = vpop.f32.mrf.mxu0
        %v380 = vadd.f32 %v282, %v379
        %v381 = vpop.f32.mrf.mxu0
        %v382 = vadd.f32 %v282, %v381
        %383 = vmatmul.bf16.gmra.mxu0 %v316
        %v384 = vpop.f32.mrf.mxu0
        %v385 = vadd.f32 %v282, %v384
        %v386 = vpop.f32.mrf.mxu0
        %v387 = vadd.f32 %v282, %v386
        %388 = vmatmul.bf16.gmra.mxu0 %v319
        %v389 = vpop.f32.mrf.mxu0
        %v390 = vadd.f32 %v282, %v389
        %v391 = vpop.f32.mrf.mxu0
        %v392 = vadd.f32 %v282, %v391
        %393 = vmatmul.bf16.gmra.mxu0 %v322
        %v394 = vpop.f32.mrf.mxu0
        %v395 = vadd.f32 %v282, %v394
        %v396 = vpop.f32.mrf.mxu0
        %v397 = vadd.f32 %v282, %v396
        %398 = vmatmul.bf16.gmra.mxu0 %v325
        %v399 = vpop.f32.mrf.mxu0
        %v400 = vadd.f32 %v282, %v399
        %v401 = vpop.f32.mrf.mxu0
        %v402 = vadd.f32 %v282, %v401
        %403 = vmatmul.bf16.gmra.mxu0 %v328
        %v404 = vpop.f32.mrf.mxu0
        %v405 = vadd.f32 %v282, %v404
        %v406 = vpop.f32.mrf.mxu0
        %v407 = vadd.f32 %v282, %v406
        %408 = vmatmul.bf16.gmra.mxu0 %v331
        %v409 = vpop.f32.mrf.mxu0
        %v410 = vadd.f32 %v282, %v409
        %v411 = vpop.f32.mrf.mxu0
        %v412 = vadd.f32 %v282, %v411
        %413 = vmatmul.bf16.gmra.mxu0 %v334
        %v414 = vpop.f32.mrf.mxu0
        %v415 = vadd.f32 %v282, %v414
        %v416 = vpop.f32.mrf.mxu0
        %v417 = vadd.f32 %v282, %v416
        %418 = vmatmul.bf16.gmra.mxu0 %v337
        %v419 = vpop.f32.mrf.mxu0
        %v420 = vadd.f32 %v282, %v419
        %v421 = vpop.f32.mrf.mxu0
        %v422 = vadd.f32 %v282, %v421
        %423 = vmatmul.bf16.gmra.mxu0 %v340
        %v424 = vpop.f32.mrf.mxu0
        %v425 = vadd.f32 %v282, %v424
        %v426 = vpop.f32.mrf.mxu0
        %v427 = vadd.f32 %v282, %v426
        %428 = vmatmul.bf16.gmra.mxu0 %v343
        %v429 = vpop.f32.mrf.mxu0
        %v430 = vadd.f32 %v282, %v429
        %v431 = vpop.f32.mrf.mxu0
        %v432 = vadd.f32 %v282, %v431
        %433 = vdwg.mxu0
        %v434 = vmax.f32 %v355, 0.0
        %v435 = vmax.f32 %v357, 0.0
        %v436 = vmax.f32 %v360, 0.0
        %v437 = vmax.f32 %v362, 0.0
        %v438 = vmax.f32 %v365, 0.0
        %v439 = vmax.f32 %v367, 0.0
        %v440 = vmax.f32 %v370, 0.0
        %v441 = vmax.f32 %v372, 0.0
        %v442 = vmax.f32 %v375, 0.0
        %v443 = vmax.f32 %v377, 0.0
        %v444 = vmax.f32 %v380, 0.0
        %v445 = vmax.f32 %v382, 0.0
        %v446 = vmax.f32 %v385, 0.0
        %v447 = vmax.f32 %v387, 0.0
        %v448 = vmax.f32 %v390, 0.0
        %v449 = vmax.f32 %v392, 0.0
        %v450 = vmax.f32 %v395, 0.0
        %v451 = vmax.f32 %v397, 0.0
        %v452 = vmax.f32 %v400, 0.0
        %v453 = vmax.f32 %v402, 0.0
        %v454 = vmax.f32 %v405, 0.0
        %v455 = vmax.f32 %v407, 0.0
        %v456 = vmax.f32 %v410, 0.0
        %v457 = vmax.f32 %v412, 0.0
        %v458 = vmax.f32 %v415, 0.0
        %v459 = vmax.f32 %v417, 0.0
        %v460 = vmax.f32 %v420, 0.0
        %v461 = vmax.f32 %v422, 0.0
        %v462 = vmax.f32 %v425, 0.0
        %v463 = vmax.f32 %v427, 0.0
        %v464 = vmax.f32 %v430, 0.0
        %v465 = vmax.f32 %v432, 0.0
        %v466 = vpack.c.bf16 %v435, %v434
        %v467 = vpack.c.bf16 %v437, %v436
        %v468 = vpack.c.bf16 %v439, %v438
        %v469 = vpack.c.bf16 %v441, %v440
        %v470 = vpack.c.bf16 %v443, %v442
        %v471 = vpack.c.bf16 %v445, %v444
        %v472 = vpack.c.bf16 %v447, %v446
        %v473 = vpack.c.bf16 %v449, %v448
        %v474 = vpack.c.bf16 %v451, %v450
        %v475 = vpack.c.bf16 %v453, %v452
        %v476 = vpack.c.bf16 %v455, %v454
        %v477 = vpack.c.bf16 %v457, %v456
        %v478 = vpack.c.bf16 %v459, %v458
        %v479 = vpack.c.bf16 %v461, %v460
        %v480 = vpack.c.bf16 %v463, %v462
        %v481 = vpack.c.bf16 %v465, %v464
        %v482 = vld [vmem:[%s3] sm:$0x1]
        %s483 = sld [smem:[#allocation2]]
        %v484 = vstv %s483
        %485 = vmatpush.bf16.xpose.msra.mxu0 %v473
        %486 = vmatpush.bf16.xpose.msra.mxu0 %v472
        %487 = vmatpush.bf16.xpose.msra.mxu0 %v471
        %488 = vmatpush.bf16.xpose.msra.mxu0 %v470
        %489 = vmatpush.bf16.xpose.msra.mxu0 %v469
        %490 = vmatpush.bf16.xpose.msra.mxu0 %v468
        %491 = vmatpush.bf16.xpose.msra.mxu0 %v467
        %492 = vmatpush.bf16.xpose.msra.mxu0 %v466
        %493 = vmatmul.bf16.gmra.mxu0 %v482
        %v494 = vpop.f32.mrf.mxu0
        %v495 = vadd.f32 %v484, %v494
        %v496 = vpop.f32.mrf.mxu0
        %497 = vdwg.mxu0
        %498 = vmatpush.bf16.xpose.msra.mxu0 %v481
        %499 = vmatpush.bf16.xpose.msra.mxu0 %v480
        %500 = vmatpush.bf16.xpose.msra.mxu0 %v479
        %501 = vmatpush.bf16.xpose.msra.mxu0 %v478
        %502 = vmatpush.bf16.xpose.msra.mxu0 %v477
        %503 = vmatpush.bf16.xpose.msra.mxu0 %v476
        %504 = vmatpush.bf16.xpose.msra.mxu0 %v475
        %505 = vmatpush.bf16.xpose.msra.mxu0 %v474
        %506 = vmatmul.bf16.gmra.mxu0 %v482
        %v507 = vpop.f32.mrf.mxu0
        %v508 = vadd.f32 %v484, %v507
        %v509 = vpop.f32.mrf.mxu0
        %510 = vdwg.mxu0
        %v511 = vand.u32 2147483647, %v495
        %v512 = vand.u32 2147483647, %v508
        %v513 = vsub.f32 0.0, %v511
        %v514 = vsub.f32 0.0, %v512
        %v515 = vmul.f32 %v513, 1.442695
        %v516 = vpow.pop %v515
        %v517 = vmul.f32 %v514, 1.442695
        %v518 = vpow.pop %v517
        %v519 = vadd.f32 %v516, 1.0
        %v520 = vadd.f32 %v518, 1.0
        %v521 = vrcp.pop %v519
        %v522 = vrcp.pop %v520
        %vm523 = vcmp.ge.f32.partialorder %v495, 0.0
        %vm524 = vcmp.ge.f32.partialorder %v508, 0.0
        %v525 = vmul.f32 %v516, %v521
        %v526 = vmul.f32 %v518, %v522
        %v527 = vsel %vm523, %v521, %v525
        %v528 = vsel %vm524, %v522, %v526
        %v531 = vrot.slane %v528, 7
        %vm532 = vcmask 1040384
        %v533 = vsel %vm532, %v527, %v531
        %v535 = vlaneseq
        %vm536 = vcmp.ge.s32.totalorder %v535, 0
        %vm537 = vcmp.lt.s32.totalorder %v535, 256
        %vm538 = vmand %vm536, %vm537
        %539 = vst.msk [vmem:[%s219] sm:$0x3] %vm538, %v533
        %s540 = sand.u32 %s138, 1
        %s541 = scalar_lea.sflag [#allocation4], %s540
        %s542 = sand.u32 %s138, 1
        %s543 = smul.addr %s542, 2
        %s544 = scalar_lea.vmem [#allocation3], %s543
        // Predicated region
        $region41: #{tpu_custom_call.1} parent=39 // pred_check
          %p545 = pneg %p148
        $region42: #{tpu_custom_call.1} parent=39 // pred_check_branch
          %547 = sbr.rel (%p545) target = $region44
        $region43: #{tpu_custom_call.1} parent=39 // pred_region
          %s548 = smul.u32 2, %s20
          %550 = vsyncadd %s541, 0
          %s551 = scalar_lea.hbm %s5, %s548
          %s553 = sshll.u32 %s544, 4
          %s554 = int_to_ptr.vmem [resolvable:$true] %s553
          %s555 = sshll.u32 %s551, 4
          %s556 = int_to_ptr.hbm [resolvable:$true] %s555
          %558 = dma.vmem_to_hbm [thread:$0]  %s554, 32, %s556, %s541
        $region44: #{tpu_custom_call.1} parent=39 // pred_fallthru
          _
      $region40: #{tpu_custom_call.1} parent=5 // pred_fallthru
        _
      %p559 = scmp.le.s32.totalorder 2, %s15
      // Predicated region
      $region45: #{tpu_custom_call.1} parent=5 // pred_check
        %p560 = pneg %p559
      $region46: #{tpu_custom_call.1} parent=5 // pred_check_branch
        %562 = sbr.rel (%p560) target = $region48
      $region47: #{tpu_custom_call.1} parent=5 // pred_region
        %s563 = ssub.s32 %s15, 2
        // Predicated region
        $region49: #{tpu_custom_call.1} parent=47 // pred_check
          %p564 = pneg %p154
        $region50: #{tpu_custom_call.1} parent=47 // pred_check_branch
          %566 = sbr.rel (%p564) target = $region52
        $region51: #{tpu_custom_call.1} parent=47 // pred_region
          %s567 = sand.u32 %s139, 1
          %s568 = scalar_lea.sflag [#allocation4], %s567
          %s569 = sand.u32 %s139, 1
          %s570 = smul.addr %s569, 2
          %s571 = scalar_lea.vmem [#allocation3], %s570
          %573 = dma.done %s568, 32
        $region52: #{tpu_custom_call.1} parent=47 // pred_fallthru
          _
      $region48: #{tpu_custom_call.1} parent=5 // pred_fallthru
        _
    $region6: #{tpu_custom_call.1} parent=1 // loop_footer
      %s19 = sadd.s32 1, %s15
    $region7: #{tpu_custom_call.1} parent=1 // loop_footer_branch
      %14 = sbr.rel target = $region3
    $region8: #{tpu_custom_call.1} parent=1 // loop_exit
      _
    %574 = vsyncpa [#allocation4], 1
    %s575 = scalar_lea.sflag [#allocation4], 1
    %576 = vsyncpa %s575, 1

</llo_original>
